<compile_context>
chip_gen: v7x
topology: tpu7x:2x2x1
jax: 0.10.0
libtpu: 0.0.40
codegen_flags: <defaults>
</compile_context>

<pallas_src>
import functools

import jax
import jax.numpy as jnp
from jax.experimental import pallas as pl
from jax.experimental.pallas import tpu as pltpu


# ---------------------------------------------------------------------------
# Wrapper-side helpers
# ---------------------------------------------------------------------------
def _physical_vmem_bytes():
    """Physical VMEM of the local TPU, with a v7x-safe (64 MiB) fallback."""
    default = 64 * 1024 * 1024
    try:
        info = pltpu.get_tpu_info()
    except Exception:
        return default
    for attr in ("vmem_capacity_bytes", "vmem_size_bytes", "vmem_bytes"):
        val = getattr(info, attr, None)
        if isinstance(val, int) and val > 0:
            return val
    return default


def _pick_c_block(c, hw, itemsize, x_budget_bytes):
    """Channel block: as large as the double-buffered x-tile budget allows.

    Returns c itself when c <= 8 (single slab).  Otherwise returns a multiple
    of 8 so the in-kernel 8-channel slab loop is uniform; a channel tail
    (c % c_blk != 0) is handled by masking inside the kernel (cdiv grid).
    """
    if c <= 8:
        return c
    max_cb = max(int(x_budget_bytes // (2 * hw * itemsize)), 8)
    cb = min(max_cb, c)
    cb = max((cb // 8) * 8, 8)
    cb = min(cb, max((c // 8) * 8, 8))
    return cb


def _weighted_offset_masks(h, w, conv_weight):
    """(18, H*W) f32: per-tap boundary masks pre-multiplied by the conv weights.

    Row k in [0, 9)  : mask[k] * weight[0, 0, k//3, k%3]   (avg feature)
    Row 9 + k        : mask[k] * weight[0, 1, k//3, k%3]   (max feature)
    mask[k][p] = 1 iff tap (dh, dw) = (k//3 - 1, k%3 - 1) applied at output
    position p = h_idx*W + w_idx stays inside the image (zero padding).
    """
    hi = jnp.arange(h, dtype=jnp.int32)[:, None]
    wi = jnp.arange(w, dtype=jnp.int32)[None, :]
    masks = []
    for dh in (-1, 0, 1):
        for dw in (-1, 0, 1):
            mh = (hi + dh >= 0) & (hi + dh <= h - 1)
            mw = (wi + dw >= 0) & (wi + dw <= w - 1)
            masks.append((mh & mw).astype(jnp.float32).reshape(h * w))
    masks = jnp.stack(masks)                                  # (9, H*W)
    wts = conv_weight.astype(jnp.float32).reshape(2, 9)       # [in_channel, tap]
    return jnp.concatenate([masks * wts[0][:, None],
                            masks * wts[1][:, None]], axis=0)  # (18, H*W)


# ---------------------------------------------------------------------------
# Kernel
# ---------------------------------------------------------------------------
def _spatial_attention_kernel(wm_ref, x_ref, o_ref, sum_ref, max_ref, *,
                              c_total, img_w):
    """One (batch, channel-block) grid step.

    wm_ref : (18, HW) f32   resident weighted boundary masks.
    x_ref  : (1, C_BLK, HW) x tile (native dtype), HW on lanes (dense).
    o_ref  : (1, 1, HW)     output tile, revisited across the channel axis.
    sum_ref: (R, HW) f32    channel-sum accumulator (R = min(8, C_BLK)).
    max_ref: (R, HW) x-dtype channel-max accumulator.
    """
    c_idx = pl.program_id(1)
    last = pl.num_programs(1) - 1
    c_blk = x_ref.shape[1]
    hw = x_ref.shape[2]
    r = sum_ref.shape[0]
    rem = c_total % c_blk                       # static Python int

    # ---- init accumulators on the first channel step of this batch ----------
    @pl.when(c_idx == 0)
    def _init():
        sum_ref[...] = jnp.zeros_like(sum_ref)
        max_ref[...] = jnp.full_like(max_ref, -jnp.inf)

    # ---- single pass over x: slab-wise sum / max accumulation ---------------
    def _accumulate(n_full, n_tail_rows):
        acc_s = sum_ref[...]
        acc_m = max_ref[...]

        def one_slab(start, a_s, a_m):
            slab = x_ref[0, pl.ds(start, r), :]          # (r, HW), native dtype
            return a_s + slab.astype(jnp.float32), jnp.maximum(a_m, slab)

        if 0 < n_full <= 16:
            for i in range(n_full):                      # static unroll
                acc_s, acc_m = one_slab(i * r, acc_s, acc_m)
        elif n_full > 16:
            def body(i, carry):
                return one_slab(pl.multiple_of(i * r, r), *carry)
            acc_s, acc_m = jax.lax.fori_loop(0, n_full, body, (acc_s, acc_m),
                                             unroll=8)

        if n_tail_rows:                                  # masked partial slab
            slab = x_ref[0, pl.ds(n_full * r, r), :]
            row = jax.lax.broadcasted_iota(jnp.int32, slab.shape, 0)
            valid = row < n_tail_rows
            acc_s = acc_s + jnp.where(valid, slab, 0).astype(jnp.float32)
            acc_m = jnp.maximum(
                acc_m, jnp.where(valid, slab, jnp.asarray(-jnp.inf, slab.dtype)))

        sum_ref[...] = acc_s
        max_ref[...] = acc_m

    if rem == 0:
        _accumulate(c_blk // r, 0)
    else:
        @pl.when(c_idx != last)
        def _full_step():
            _accumulate(c_blk // r, 0)

        @pl.when(c_idx == last)
        def _tail_step():
            _accumulate(rem // r, rem % r)

    # ---- last channel step: 3x3 conv over [avg, max] + sigmoid --------------
    @pl.when(c_idx == last)
    def _finalize():
        s_tot = jnp.sum(sum_ref[...], axis=0, keepdims=True)          # (1, HW) f32
        m_tot = jnp.max(max_ref[...], axis=0, keepdims=True).astype(jnp.float32)
        avg = s_tot * jnp.float32(1.0 / c_total)

        acc = jnp.zeros((1, hw), jnp.float32)
        for dh in (-1, 0, 1):
            for dw in (-1, 0, 1):
                k = (dh + 1) * 3 + (dw + 1)
                s = dh * img_w + dw                     # flat-domain tap offset
                if s == 0:
                    a_sh, m_sh = avg, m_tot
                else:
                    shift = (-s) % hw                    # rolled[p] = feat[p + s]
                    a_sh = pltpu.roll(avg, shift=shift, axis=1)
                    m_sh = pltpu.roll(m_tot, shift=shift, axis=1)
                acc = (acc
                       + wm_ref[k:k + 1, :] * a_sh
                       + wm_ref[9 + k:10 + k, :] * m_sh)

        att = pl.reciprocal(1.0 + jnp.exp(-acc), approx=True)          # sigmoid
        o_ref[0] = att.astype(o_ref.dtype)


# ---------------------------------------------------------------------------
# Public wrapper
# ---------------------------------------------------------------------------
def spatial_attention(x, conv_weight):
    """Pallas TPU implementation of SpatialAttention.forward.

    x:           (N, C, H, W) floating point
    conv_weight: (1, 2, 3, 3) -- Conv2d(2, 1, 3, padding=1, bias=False).weight
    returns:     (N, 1, H, W) attention map, dtype == x.dtype
    """
    n, c, h, w = x.shape
    assert conv_weight.shape == (1, 2, 3, 3), conv_weight.shape
    if not jnp.issubdtype(x.dtype, jnp.floating):
        raise ValueError("spatial_attention expects a floating-point input")

    hw = h * w
    itemsize = jnp.dtype(x.dtype).itemsize

    vmem_phys = _physical_vmem_bytes()
    x_budget = int(vmem_phys * 0.40)            # double-buffered x tiles
    c_blk = _pick_c_block(c, hw, itemsize, x_budget)
    r = min(8, c_blk)

    # Guard: even the smallest channel block must fit comfortably in VMEM.
    # TODO(synk): spatial (H) tiling with 1-row halos for very large H*W.
    min_bytes = 2 * r * hw * itemsize + 2 * 18 * hw * 4 + r * hw * (4 + itemsize)
    if min_bytes > int(0.8 * vmem_phys):
        raise ValueError(
            f"H*W={hw} too large for the single-plane SpatialAttention kernel "
            f"({min_bytes} bytes needed, {vmem_phys} bytes of VMEM).")

    grid_c = pl.cdiv(c, c_blk)
    x_flat = x.reshape(n, c, hw)                        # lane-dense view (free)
    wm = _weighted_offset_masks(h, w, conv_weight)      # (18, H*W) f32

    # Explicit scoped-VMEM limit (v5e's default is only 16 MiB).
    usage = (2 * c_blk * hw * itemsize                  # double-buffered x tile
             + 2 * hw * itemsize                        # double-buffered output
             + 2 * 18 * hw * 4                          # resident masks
             + r * hw * (4 + itemsize)                  # accumulators
             + (4 << 20))                               # headroom
    vmem_limit = int(min(0.92 * vmem_phys, max(usage, 32 << 20)))

    kernel = functools.partial(_spatial_attention_kernel, c_total=c, img_w=w)

    out_flat = pl.pallas_call(
        kernel,
        out_shape=jax.ShapeDtypeStruct((n, 1, hw), x.dtype),
        grid=(n, grid_c),
        in_specs=[
            # Weighted masks: constant block index -> fetched once, stays resident.
            pl.BlockSpec((18, hw), lambda i, j: (0, 0)),
            # x tile; consider pipeline_mode=pl.Buffered(3) on v7x if VMEM allows.
            pl.BlockSpec((1, c_blk, hw), lambda i, j: (i, j, 0)),
        ],
        out_specs=pl.BlockSpec((1, 1, hw), lambda i, j: (i, 0, 0)),
        scratch_shapes=[
            pltpu.VMEM((r, hw), jnp.float32),   # channel-sum accumulator
            pltpu.VMEM((r, hw), x.dtype),       # channel-max accumulator
        ],
        compiler_params=pltpu.CompilerParams(
            dimension_semantics=("parallel", "arbitrary"),
            vmem_limit_bytes=vmem_limit),
    )(wm, x_flat)

    return out_flat.reshape(n, 1, h, w)


# ---------------------------------------------------------------------------
# Pure-JAX reference and self-test
# ---------------------------------------------------------------------------
def spatial_attention_reference(x, conv_weight):
    """Pure-JAX reference (mean/max over C -> 3x3 conv pad=1 -> sigmoid)."""
    xf = x.astype(jnp.float32)
    avg = jnp.mean(xf, axis=1, keepdims=True)
    mx = jnp.max(xf, axis=1, keepdims=True)
    feats = jnp.concatenate([avg, mx], axis=1)                 # (N, 2, H, W)
    y = jax.lax.conv_general_dilated(
        feats, conv_weight.astype(jnp.float32),
        window_strides=(1, 1), padding=((1, 1), (1, 1)),
        dimension_numbers=("NCHW", "OIHW", "NCHW"))
    return jax.nn.sigmoid(y).astype(x.dtype)


if __name__ == "__main__":
    key = jax.random.PRNGKey(0)
    kx, kw = jax.random.split(key)

    n, c, h, w = 2, 4, 16, 16
    x = jax.random.normal(kx, (n, c, h, w), dtype=jnp.float32)
    conv_weight = 0.2 * jax.random.normal(kw, (1, 2, 3, 3), dtype=jnp.float32)

    out = jax.jit(spatial_attention)(x, conv_weight)
    out = jax.block_until_ready(out)
    assert out.shape == (n, 1, h, w), out.shape

    ref = spatial_attention_reference(x, conv_weight)
    max_err = float(jnp.max(jnp.abs(out.astype(jnp.float32) - ref.astype(jnp.float32))))
    assert max_err < 5e-3, f"kernel does not match reference, max abs err = {max_err}"

    print("KERNEL_OK")
</pallas_src>

<mosaic_0001>
module attributes {stable_mosaic.version = 11 : i64} {
  func.func @_spatial_attention_kernel(%arg0: i32, %arg1: i32, %arg2: memref<18x256xf32, #tpu.memory_space<vmem>>, %arg3: memref<1x4x256xf32, #tpu.memory_space<vmem>>, %arg4: memref<1x1x256xf32, #tpu.memory_space<vmem>>, %arg5: memref<4x256xf32, #tpu.memory_space<vmem>>, %arg6: memref<4x256xf32, #tpu.memory_space<vmem>>) attributes {dimension_semantics = [#tpu.dimension_semantics<parallel>, #tpu.dimension_semantics<arbitrary>], iteration_bounds = array<i64: 2, 1>, scalar_prefetch = 0 : i64, scratch_operands = 2 : i64, tpu.core_type = #tpu.core_type<tc>, window_params = [{pipeline_mode = #tpu.pipeline_mode<synchronous>, transform_indices = @transform_0, window_bounds = array<i64: 18, 256>}, {transform_indices = @transform_1, window_bounds = array<i64: 1, 4, 256>}, {transform_indices = @transform_2, window_bounds = array<i64: 1, 1, 256>}]} {
    %c0_i32 = arith.constant 0 : i32
    %0 = arith.cmpi eq, %arg1, %c0_i32 : i32
    %1 = arith.extui %0 : i1 to i32
    %c0_i32_0 = arith.constant 0 : i32
    %2 = arith.cmpi ne, %1, %c0_i32_0 : i32
    scf.if %2 {
      %cst = arith.constant 0.000000e+00 : f32
      %14 = vector.broadcast %cst : f32 to vector<4x256xf32>
      %c0_13 = arith.constant 0 : index
      %c0_14 = arith.constant 0 : index
      %15 = vector.load %arg5[%c0_13, %c0_14] : memref<4x256xf32, #tpu.memory_space<vmem>>, vector<4x256xf32>
      tpu.vector_store %arg5[%c0_13, %c0_14], %14 {strides = array<i32>} : memref<4x256xf32, #tpu.memory_space<vmem>>, vector<4x256xf32>,
      %cst_15 = arith.constant 0xFF800000 : f32
      %16 = vector.broadcast %cst_15 : f32 to vector<4x256xf32>
      %c0_16 = arith.constant 0 : index
      %c0_17 = arith.constant 0 : index
      %17 = vector.load %arg6[%c0_16, %c0_17] : memref<4x256xf32, #tpu.memory_space<vmem>>, vector<4x256xf32>
      tpu.vector_store %arg6[%c0_16, %c0_17], %16 {strides = array<i32>} : memref<4x256xf32, #tpu.memory_space<vmem>>, vector<4x256xf32>,
    } else {
    }
    %c0 = arith.constant 0 : index
    %c0_1 = arith.constant 0 : index
    %3 = vector.load %arg5[%c0, %c0_1] : memref<4x256xf32, #tpu.memory_space<vmem>>, vector<4x256xf32>
    %c0_2 = arith.constant 0 : index
    %c0_3 = arith.constant 0 : index
    %4 = vector.load %arg6[%c0_2, %c0_3] : memref<4x256xf32, #tpu.memory_space<vmem>>, vector<4x256xf32>
    %c0_4 = arith.constant 0 : index
    %c0_5 = arith.constant 0 : index
    %c0_6 = arith.constant 0 : index
    %5 = vector.load %arg3[%c0_4, %c0_5, %c0_6] : memref<1x4x256xf32, #tpu.memory_space<vmem>>, vector<1x4x256xf32>
    %6 = vector.shape_cast %5 : vector<1x4x256xf32> to vector<4x256xf32>
    %7 = arith.addf %3, %6 : vector<4x256xf32>
    %8 = arith.maximumf %4, %6 : vector<4x256xf32>
    %c0_7 = arith.constant 0 : index
    %c0_8 = arith.constant 0 : index
    %9 = vector.load %arg5[%c0_7, %c0_8] : memref<4x256xf32, #tpu.memory_space<vmem>>, vector<4x256xf32>
    tpu.vector_store %arg5[%c0_7, %c0_8], %7 {strides = array<i32>} : memref<4x256xf32, #tpu.memory_space<vmem>>, vector<4x256xf32>,
    %c0_9 = arith.constant 0 : index
    %c0_10 = arith.constant 0 : index
    %10 = vector.load %arg6[%c0_9, %c0_10] : memref<4x256xf32, #tpu.memory_space<vmem>>, vector<4x256xf32>
    tpu.vector_store %arg6[%c0_9, %c0_10], %8 {strides = array<i32>} : memref<4x256xf32, #tpu.memory_space<vmem>>, vector<4x256xf32>,
    %c0_i32_11 = arith.constant 0 : i32
    %11 = arith.cmpi eq, %arg1, %c0_i32_11 : i32
    %12 = arith.extui %11 : i1 to i32
    %c0_i32_12 = arith.constant 0 : i32
    %13 = arith.cmpi ne, %12, %c0_i32_12 : i32
    scf.if %13 {
      %c0_13 = arith.constant 0 : index
      %c0_14 = arith.constant 0 : index
      %14 = vector.load %arg5[%c0_13, %c0_14] : memref<4x256xf32, #tpu.memory_space<vmem>>, vector<4x256xf32>
      %cst = arith.constant dense<0.000000e+00> : vector<256xf32>
      %15 = vector.multi_reduction <add>, %14, %cst [0] : vector<4x256xf32> to vector<256xf32>
      %16 = vector.shape_cast %15 : vector<256xf32> to vector<1x256xf32>
      %c0_15 = arith.constant 0 : index
      %c0_16 = arith.constant 0 : index
      %17 = vector.load %arg6[%c0_15, %c0_16] : memref<4x256xf32, #tpu.memory_space<vmem>>, vector<4x256xf32>
      %cst_17 = arith.constant dense<0xFF800000> : vector<256xf32>
      %18 = vector.multi_reduction <maximumf>, %17, %cst_17 [0] : vector<4x256xf32> to vector<256xf32>
      %19 = vector.shape_cast %18 : vector<256xf32> to vector<1x256xf32>
      %cst_18 = arith.constant 2.500000e-01 : f32
      %20 = vector.broadcast %cst_18 : f32 to vector<1x256xf32>
      %21 = arith.mulf %16, %20 : vector<1x256xf32>
      %cst_19 = arith.constant 0.000000e+00 : f32
      %22 = vector.broadcast %cst_19 : f32 to vector<1x256xf32>
      %c17_i32 = arith.constant 17 : i32
      %23 = tpu.dynamic_rotate %21 by %c17_i32 dim 1 : vector<1x256xf32>, i32 -> vector<1x256xf32>
      %c17_i32_20 = arith.constant 17 : i32
      %24 = tpu.dynamic_rotate %19 by %c17_i32_20 dim 1 : vector<1x256xf32>, i32 -> vector<1x256xf32>
      %c0_21 = arith.constant 0 : index
      %c0_22 = arith.constant 0 : index
      %25 = vector.load %arg2[%c0_21, %c0_22] : memref<18x256xf32, #tpu.memory_space<vmem>>, vector<1x256xf32>
      %26 = arith.mulf %25, %23 : vector<1x256xf32>
      %27 = arith.addf %22, %26 : vector<1x256xf32>
      %c9 = arith.constant 9 : index
      %c0_23 = arith.constant 0 : index
      %28 = vector.load %arg2[%c9, %c0_23] : memref<18x256xf32, #tpu.memory_space<vmem>>, vector<1x256xf32>
      %29 = arith.mulf %28, %24 : vector<1x256xf32>
      %30 = arith.addf %27, %29 : vector<1x256xf32>
      %c16_i32 = arith.constant 16 : i32
      %31 = tpu.dynamic_rotate %21 by %c16_i32 dim 1 : vector<1x256xf32>, i32 -> vector<1x256xf32>
      %c16_i32_24 = arith.constant 16 : i32
      %32 = tpu.dynamic_rotate %19 by %c16_i32_24 dim 1 : vector<1x256xf32>, i32 -> vector<1x256xf32>
      %c1 = arith.constant 1 : index
      %c0_25 = arith.constant 0 : index
      %33 = vector.load %arg2[%c1, %c0_25] : memref<18x256xf32, #tpu.memory_space<vmem>>, vector<1x256xf32>
      %34 = arith.mulf %33, %31 : vector<1x256xf32>
      %35 = arith.addf %30, %34 : vector<1x256xf32>
      %c10 = arith.constant 10 : index
      %c0_26 = arith.constant 0 : index
      %36 = vector.load %arg2[%c10, %c0_26] : memref<18x256xf32, #tpu.memory_space<vmem>>, vector<1x256xf32>
      %37 = arith.mulf %36, %32 : vector<1x256xf32>
      %38 = arith.addf %35, %37 : vector<1x256xf32>
      %c15_i32 = arith.constant 15 : i32
      %39 = tpu.dynamic_rotate %21 by %c15_i32 dim 1 : vector<1x256xf32>, i32 -> vector<1x256xf32>
      %c15_i32_27 = arith.constant 15 : i32
      %40 = tpu.dynamic_rotate %19 by %c15_i32_27 dim 1 : vector<1x256xf32>, i32 -> vector<1x256xf32>
      %c2 = arith.constant 2 : index
      %c0_28 = arith.constant 0 : index
      %41 = vector.load %arg2[%c2, %c0_28] : memref<18x256xf32, #tpu.memory_space<vmem>>, vector<1x256xf32>
      %42 = arith.mulf %41, %39 : vector<1x256xf32>
      %43 = arith.addf %38, %42 : vector<1x256xf32>
      %c11 = arith.constant 11 : index
      %c0_29 = arith.constant 0 : index
      %44 = vector.load %arg2[%c11, %c0_29] : memref<18x256xf32, #tpu.memory_space<vmem>>, vector<1x256xf32>
      %45 = arith.mulf %44, %40 : vector<1x256xf32>
      %46 = arith.addf %43, %45 : vector<1x256xf32>
      %c1_i32 = arith.constant 1 : i32
      %47 = tpu.dynamic_rotate %21 by %c1_i32 dim 1 : vector<1x256xf32>, i32 -> vector<1x256xf32>
      %c1_i32_30 = arith.constant 1 : i32
      %48 = tpu.dynamic_rotate %19 by %c1_i32_30 dim 1 : vector<1x256xf32>, i32 -> vector<1x256xf32>
      %c3 = arith.constant 3 : index
      %c0_31 = arith.constant 0 : index
      %49 = vector.load %arg2[%c3, %c0_31] : memref<18x256xf32, #tpu.memory_space<vmem>>, vector<1x256xf32>
      %50 = arith.mulf %49, %47 : vector<1x256xf32>
      %51 = arith.addf %46, %50 : vector<1x256xf32>
      %c12 = arith.constant 12 : index
      %c0_32 = arith.constant 0 : index
      %52 = vector.load %arg2[%c12, %c0_32] : memref<18x256xf32, #tpu.memory_space<vmem>>, vector<1x256xf32>
      %53 = arith.mulf %52, %48 : vector<1x256xf32>
      %54 = arith.addf %51, %53 : vector<1x256xf32>
      %c4 = arith.constant 4 : index
      %c0_33 = arith.constant 0 : index
      %55 = vector.load %arg2[%c4, %c0_33] : memref<18x256xf32, #tpu.memory_space<vmem>>, vector<1x256xf32>
      %56 = arith.mulf %55, %21 : vector<1x256xf32>
      %57 = arith.addf %54, %56 : vector<1x256xf32>
      %c13 = arith.constant 13 : index
      %c0_34 = arith.constant 0 : index
      %58 = vector.load %arg2[%c13, %c0_34] : memref<18x256xf32, #tpu.memory_space<vmem>>, vector<1x256xf32>
      %59 = arith.mulf %58, %19 : vector<1x256xf32>
      %60 = arith.addf %57, %59 : vector<1x256xf32>
      %c255_i32 = arith.constant 255 : i32
      %61 = tpu.dynamic_rotate %21 by %c255_i32 dim 1 : vector<1x256xf32>, i32 -> vector<1x256xf32>
      %c255_i32_35 = arith.constant 255 : i32
      %62 = tpu.dynamic_rotate %19 by %c255_i32_35 dim 1 : vector<1x256xf32>, i32 -> vector<1x256xf32>
      %c5 = arith.constant 5 : index
      %c0_36 = arith.constant 0 : index
      %63 = vector.load %arg2[%c5, %c0_36] : memref<18x256xf32, #tpu.memory_space<vmem>>, vector<1x256xf32>
      %64 = arith.mulf %63, %61 : vector<1x256xf32>
      %65 = arith.addf %60, %64 : vector<1x256xf32>
      %c14 = arith.constant 14 : index
      %c0_37 = arith.constant 0 : index
      %66 = vector.load %arg2[%c14, %c0_37] : memref<18x256xf32, #tpu.memory_space<vmem>>, vector<1x256xf32>
      %67 = arith.mulf %66, %62 : vector<1x256xf32>
      %68 = arith.addf %65, %67 : vector<1x256xf32>
      %c241_i32 = arith.constant 241 : i32
      %69 = tpu.dynamic_rotate %21 by %c241_i32 dim 1 : vector<1x256xf32>, i32 -> vector<1x256xf32>
      %c241_i32_38 = arith.constant 241 : i32
      %70 = tpu.dynamic_rotate %19 by %c241_i32_38 dim 1 : vector<1x256xf32>, i32 -> vector<1x256xf32>
      %c6 = arith.constant 6 : index
      %c0_39 = arith.constant 0 : index
      %71 = vector.load %arg2[%c6, %c0_39] : memref<18x256xf32, #tpu.memory_space<vmem>>, vector<1x256xf32>
      %72 = arith.mulf %71, %69 : vector<1x256xf32>
      %73 = arith.addf %68, %72 : vector<1x256xf32>
      %c15 = arith.constant 15 : index
      %c0_40 = arith.constant 0 : index
      %74 = vector.load %arg2[%c15, %c0_40] : memref<18x256xf32, #tpu.memory_space<vmem>>, vector<1x256xf32>
      %75 = arith.mulf %74, %70 : vector<1x256xf32>
      %76 = arith.addf %73, %75 : vector<1x256xf32>
      %c240_i32 = arith.constant 240 : i32
      %77 = tpu.dynamic_rotate %21 by %c240_i32 dim 1 : vector<1x256xf32>, i32 -> vector<1x256xf32>
      %c240_i32_41 = arith.constant 240 : i32
      %78 = tpu.dynamic_rotate %19 by %c240_i32_41 dim 1 : vector<1x256xf32>, i32 -> vector<1x256xf32>
      %c7 = arith.constant 7 : index
      %c0_42 = arith.constant 0 : index
      %79 = vector.load %arg2[%c7, %c0_42] : memref<18x256xf32, #tpu.memory_space<vmem>>, vector<1x256xf32>
      %80 = arith.mulf %79, %77 : vector<1x256xf32>
      %81 = arith.addf %76, %80 : vector<1x256xf32>
      %c16 = arith.constant 16 : index
      %c0_43 = arith.constant 0 : index
      %82 = vector.load %arg2[%c16, %c0_43] : memref<18x256xf32, #tpu.memory_space<vmem>>, vector<1x256xf32>
      %83 = arith.mulf %82, %78 : vector<1x256xf32>
      %84 = arith.addf %81, %83 : vector<1x256xf32>
      %c239_i32 = arith.constant 239 : i32
      %85 = tpu.dynamic_rotate %21 by %c239_i32 dim 1 : vector<1x256xf32>, i32 -> vector<1x256xf32>
      %c239_i32_44 = arith.constant 239 : i32
      %86 = tpu.dynamic_rotate %19 by %c239_i32_44 dim 1 : vector<1x256xf32>, i32 -> vector<1x256xf32>
      %c8 = arith.constant 8 : index
      %c0_45 = arith.constant 0 : index
      %87 = vector.load %arg2[%c8, %c0_45] : memref<18x256xf32, #tpu.memory_space<vmem>>, vector<1x256xf32>
      %88 = arith.mulf %87, %85 : vector<1x256xf32>
      %89 = arith.addf %84, %88 : vector<1x256xf32>
      %c17 = arith.constant 17 : index
      %c0_46 = arith.constant 0 : index
      %90 = vector.load %arg2[%c17, %c0_46] : memref<18x256xf32, #tpu.memory_space<vmem>>, vector<1x256xf32>
      %91 = arith.mulf %90, %86 : vector<1x256xf32>
      %92 = arith.addf %89, %91 : vector<1x256xf32>
      %cst_47 = arith.constant 0.000000e+00 : f32
      %93 = vector.broadcast %cst_47 : f32 to vector<1x256xf32>
      %94 = arith.subf %93, %92 : vector<1x256xf32>
      %95 = math.exp %94 : vector<1x256xf32>
      %cst_48 = arith.constant 1.000000e+00 : f32
      %96 = vector.broadcast %cst_48 : f32 to vector<1x256xf32>
      %97 = arith.addf %96, %95 : vector<1x256xf32>
      %98 = tpu.reciprocal %97 {approx = true} : vector<1x256xf32> -> vector<1x256xf32>
      %c0_49 = arith.constant 0 : index
      %c0_50 = arith.constant 0 : index
      %c0_51 = arith.constant 0 : index
      %99 = vector.load %arg4[%c0_49, %c0_50, %c0_51] : memref<1x1x256xf32, #tpu.memory_space<vmem>>, vector<1x1x256xf32>
      %100 = vector.shape_cast %99 : vector<1x1x256xf32> to vector<1x256xf32>
      %101 = vector.shape_cast %98 : vector<1x256xf32> to vector<1x1x256xf32>
      tpu.vector_store %arg4[%c0_49, %c0_50, %c0_51], %101 {strides = array<i32>} : memref<1x1x256xf32, #tpu.memory_space<vmem>>, vector<1x1x256xf32>,
    } else {
    }
    return
  }
  func.func @transform_0(%arg0: i32, %arg1: i32) -> (i32, i32) {
    %c0_i32 = arith.constant 0 : i32
    %c0_i32_0 = arith.constant 0 : i32
    %c0_i32_1 = arith.constant 0 : i32
    return %c0_i32, %c0_i32_0 : i32, i32
  }
  func.func @transform_1(%arg0: i32, %arg1: i32) -> (i32, i32, i32) {
    %c0_i32 = arith.constant 0 : i32
    %c0_i32_0 = arith.constant 0 : i32
    return %arg0, %arg1, %c0_i32 : i32, i32, i32
  }
  func.func @transform_2(%arg0: i32, %arg1: i32) -> (i32, i32, i32) {
    %c0_i32 = arith.constant 0 : i32
    %c0_i32_0 = arith.constant 0 : i32
    %c0_i32_1 = arith.constant 0 : i32
    return %arg0, %c0_i32, %c0_i32_0 : i32, i32, i32
  }
}

</mosaic_0001>

<llo_original>
// kernel: mul.9
$region0: #{mul.9}
  %s0 = inlined_call_operand.vmem [shape: f32[3,3], index: 0, kind: input, shape index: {}]
  %s1 = inlined_call_operand.vmem [shape: f32[9], index: 1, kind: output, shape index: {}]
  $region1: #{mul.9} parent=0
    #allocation0 [shape = 'u8[4096]{0}', space=vmem, size = 0x1000, scoped, tag = 'scoped mem for output reshape']
    #allocation1 [shape = 'u8[4096]{0}', space=vmem, size = 0x1000, scoped, tag = 'scoped mem for input reshape']
    %s3 = sshllo.u32 0, 4
    %v4 = vld [vmem:[%s0] sm:%s3]
    %5 = vst [vmem:[#allocation1] sm:%s3] %v4
    %v6 = vld [vmem:[#allocation1] sm:$0x1]
    %vm7 = vcmask 23552
    %8 = vst.msk [vmem:[#allocation0] sm:$0x1] %vm7, %v6
    %s9 = scalar_lea.vmem [#allocation1], 2
    %v10 = vld [vmem:[%s9] sm:$0x1]
    %11 = vrot.lane.b32.xlu0 %v10, 6
    %v12 = vpop.permute.xlu0 %11
    %vm13 = vcmask 72752
    %14 = vst.msk [vmem:[#allocation0] sm:$0x1] %vm13, %v12
    %s15 = scalar_lea.vmem [#allocation1], 1
    %v16 = vld [vmem:[%s15] sm:$0x1]
    %17 = vrot.lane.b32.xlu0 %v16, 3
    %v18 = vpop.permute.xlu0 %17
    %vm19 = vcmask 48152
    %20 = vst.msk [vmem:[#allocation0] sm:$0x1] %vm19, %v18
    %s22 = sshllo.u32 0, 1
    %v24 = vld [vmem:[#allocation0] sm:%s22]
    %s25 = sshllo.u32 0, 1
    %26 = vst [vmem:[%s1] sm:%s25] %v24

// kernel: spatial_attention.1
$region0: #{spatial_attention.1}
  #allocation0 [shape = 'u32[]', space=smem, size = 0x4, offset = 0x4, fixed_abs, tag = 'smem constant byte address 0x4 - core index']
  #allocation1 [shape = 'u32[144,128]{1,0:T(1,128)}', space=vmem, size = 0x12000, scoped, tag = 'internal scratch']
  #allocation2 [shape = 'f32[4,256]{1,0:T(4,128)}', space=vmem, size = 0x1000, scoped, tag = 'scratch operand']
  #allocation3 [shape = 'f32[4,256]{1,0:T(4,128)}', space=vmem, size = 0x1000, scoped, tag = 'scratch operand']
  %s0 = inlined_call_operand.vmem [shape: f32[18,256], index: 0, kind: input, shape index: {}]
  %s1 = inlined_call_operand.vmem [shape: f32[2,4,256], index: 1, kind: input, shape index: {}]
  %s2 = inlined_call_operand.vmem [shape: f32[2,1,256], index: 2, kind: output, shape index: {}]
  %s3 = sld [smem:[#allocation0]]
  $region49: #{spatial_attention.1} parent=0
    _
  %s5 = ssub.s32 1, %s3
  %s6 = scalar_select 0, %s5, %s3
  loop: start=0, step=1, limit=4
  $region2: #{spatial_attention.1} parent=0 // loop_pre_header
    _
  $region3: #{spatial_attention.1} parent=0 // loop_header
    %s8 = sphi 0, %s12
    %p9 = scmp.ge.s32.totalorder %s8, 4
    %s15 = sphi 0, %s27
    %s16 = sphi 0, %s23
    %s17 = sphi 0, %s15
    %s18 = sphi 0, %s16
    %s19 = sphi 0, %s17
    %s20 = sphi 0, %s18
    %s28 = sphi 0, %s28
    %s30 = sphi 0, %s28
    %s31 = sphi 0, %s30
    %s45 = sphi 0, %s31
    %s53 = sphi 0, %s55
    %s56 = sphi 0, %s53
    %s57 = sphi 0, %s56
    %s73 = sphi 0, %s57
    %s79 = sphi 0, %s81
    %s82 = sphi 0, %s79
    %s83 = sphi 0, %s82
    %s99 = sphi 0, %s83
  $region4: #{spatial_attention.1} parent=0 // loop_header_branch
    %11 = sbr.rel (%p9) target = $region8
  $region5: #{spatial_attention.1} parent=0 // loop_body
    %s13 = ssub.s32 %s8, 1
    %s14 = ssub.s32 %s8, 2
    %s21 = sadd.s32 1, %s16
    %p22 = scmp.ge.s32.totalorder %s21, 1
    %s23 = scalar_select %p22, 0, %s21
    %s24 = sadd.s32 1, %s15
    %s25 = scalar_select %p22, %s24, %s15
    %p26 = scmp.ge.s32.totalorder %s25, 2
    %s27 = scalar_select %p26, 0, %s25
    %s29 = sadd.s32 %s28, 1
    %p32 = scmp.eq.s32.totalorder %s8, 1
    %p33 = scmp.ne.s32.totalorder %s28, %s30
    %p34 = scmp.eq.s32.totalorder %s8, 0
    %p35 = por %p33, %p34
    %p36 = scmp.ne.s32.totalorder %s28, %s30
    %p37 = scmp.eq.s32.totalorder %s13, 1
    %p38 = por %p36, %p37
    %p39 = scmp.ne.s32.totalorder %s30, %s31
    %p40 = scmp.eq.s32.totalorder %s13, 0
    %p41 = por %p39, %p40
    %p42 = scmp.ne.s32.totalorder %s30, %s31
    %p43 = scmp.eq.s32.totalorder %s14, 1
    %p44 = por %p42, %p43
    %p46 = scmp.ne.s32.totalorder %s31, %s45
    %p47 = scmp.eq.s32.totalorder %s14, 0
    %p48 = por %p46, %p47
    %s49 = ssub.s32 %s15, %s27
    %s50 = ssub.s32 %s16, %s23
    %s51 = sor.u32 %s49, %s50
    %p52 = scmp.eq.s32.totalorder %s51, 0
    %s54 = sadd.s32 %s53, 1
    %s55 = scalar_select %p52, %s53, %s54
    %p58 = pneg %p52
    %p59 = scmp.eq.s32.totalorder %s8, 1
    %p60 = por %p58, %p59
    %p61 = scmp.ne.s32.totalorder %s53, %s56
    %p62 = scmp.eq.s32.totalorder %s8, 0
    %p63 = por %p61, %p62
    %p64 = scmp.ne.s32.totalorder %s53, %s56
    %p65 = scmp.eq.s32.totalorder %s13, 1
    %p66 = por %p64, %p65
    %p67 = scmp.ne.s32.totalorder %s56, %s57
    %p68 = scmp.eq.s32.totalorder %s13, 0
    %p69 = por %p67, %p68
    %p70 = scmp.ne.s32.totalorder %s56, %s57
    %p71 = scmp.eq.s32.totalorder %s14, 1
    %p72 = por %p70, %p71
    %p74 = scmp.ne.s32.totalorder %s57, %s73
    %p75 = scmp.eq.s32.totalorder %s14, 0
    %p76 = por %p74, %p75
    %s77 = ssub.s32 %s15, %s27
    %p78 = scmp.eq.s32.totalorder %s77, 0
    %s80 = sadd.s32 %s79, 1
    %s81 = scalar_select %p78, %s79, %s80
    %p84 = pneg %p78
    %p85 = scmp.eq.s32.totalorder %s8, 1
    %p86 = por %p84, %p85
    %p87 = scmp.ne.s32.totalorder %s79, %s82
    %p88 = scmp.eq.s32.totalorder %s8, 0
    %p89 = por %p87, %p88
    %p90 = scmp.ne.s32.totalorder %s79, %s82
    %p91 = scmp.eq.s32.totalorder %s13, 1
    %p92 = por %p90, %p91
    %p93 = scmp.ne.s32.totalorder %s82, %s83
    %p94 = scmp.eq.s32.totalorder %s13, 0
    %p95 = por %p93, %p94
    %p96 = scmp.ne.s32.totalorder %s82, %s83
    %p97 = scmp.eq.s32.totalorder %s14, 1
    %p98 = por %p96, %p97
    %p100 = scmp.ne.s32.totalorder %s83, %s99
    %p101 = scmp.eq.s32.totalorder %s14, 0
    %p102 = por %p100, %p101
    %p103 = scmp.le.s32.totalorder 1, %s8
    %p104 = scmp.lt.s32.totalorder %s8, 3
    %p105 = pnand %p103, %p104
    %p106 = pneg %p105
    // Predicated region
    $region9: #{spatial_attention.1} parent=5 // pred_check
      _
    $region10: #{spatial_attention.1} parent=5 // pred_check_branch
      %108 = sbr.rel (%p105) target = $region12
    $region11: #{spatial_attention.1} parent=5 // pred_region
      %s109 = ssub.s32 %s8, 1
      // Predicated region
      $region13: #{spatial_attention.1} parent=11 // pred_check
        %p110 = pneg %p41
      $region14: #{spatial_attention.1} parent=11 // pred_check_branch
        %112 = sbr.rel (%p110) target = $region16
      $region15: #{spatial_attention.1} parent=11 // pred_region
        _
      $region16: #{spatial_attention.1} parent=11 // pred_fallthru
        _
    $region12: #{spatial_attention.1} parent=5 // pred_fallthru
      _
    %p113 = scmp.lt.s32.totalorder %s8, 2
    // Predicated region
    $region17: #{spatial_attention.1} parent=5 // pred_check
      %p114 = pneg %p113
    $region18: #{spatial_attention.1} parent=5 // pred_check_branch
      %116 = sbr.rel (%p114) target = $region20
    $region19: #{spatial_attention.1} parent=5 // pred_region
      // Predicated region
      $region21: #{spatial_attention.1} parent=19 // pred_check
        %p117 = pneg %p63
      $region22: #{spatial_attention.1} parent=19 // pred_check_branch
        %119 = sbr.rel (%p117) target = $region24
      $region23: #{spatial_attention.1} parent=19 // pred_region
        %p120 = scmp.lt.s32.totalorder %s15, 1
        %s121 = scalar_select %p120, %s15, 1
        %p122 = scmp.lt.s32.totalorder %s16, 0
        %s123 = scalar_select %p122, %s16, 0
        %s124 = smul.addr %s123, 2
        %s125 = smul.addr %s121, 2
        %s126 = sadd.s32 %s124, %s125
        %s127 = smul.addr %s126, 4
        %s128 = scalar_lea.vmem %s1, %s127
      $region24: #{spatial_attention.1} parent=19 // pred_fallthru
        _
    $region20: #{spatial_attention.1} parent=5 // pred_fallthru
      _
    %p129 = scmp.le.s32.totalorder 1, %s8
    %p130 = scmp.lt.s32.totalorder %s8, 3
    %p131 = pnand %p129, %p130
    %p132 = pneg %p131
    // Predicated region
    $region25: #{spatial_attention.1} parent=5 // pred_check
      _
    $region26: #{spatial_attention.1} parent=5 // pred_check_branch
      %134 = sbr.rel (%p131) target = $region28
    $region27: #{spatial_attention.1} parent=5 // pred_region
      %s135 = ssub.s32 %s8, 1
      %p136 = pneg %p41
      %p137 = pneg %p38
      %p138 = scmp.lt.s32.totalorder %s17, 1
      %s139 = scalar_select %p138, %s17, 1
      %p140 = scmp.lt.s32.totalorder %s18, 0
      %s141 = scalar_select %p140, %s18, 0
      %s142 = smul.addr %s141, 2
      %s143 = smul.addr %s139, 2
      %s144 = sadd.s32 %s142, %s143
      %s145 = smul.addr %s144, 4
      %s146 = scalar_lea.vmem %s1, %s145
      %p147 = pneg %p69
      %p148 = pneg %p66
      %p149 = pneg %p95
      %p150 = pneg %p92
      %p151 = scmp.lt.s32.totalorder %s17, 1
      %s152 = scalar_select %p151, %s17, 1
      %s153 = smul.addr %s152, 2
      %s154 = scalar_lea.vmem %s2, %s153
      %p155 = scmp.lt.s32.totalorder %s17, 1
      %s156 = scalar_select %p155, %s17, 1
      %p157 = scmp.lt.s32.totalorder %s18, 0
      %s158 = scalar_select %p157, %s18, 0
      %s159 = smul.addr %s158, 2
      %s160 = smul.addr %s156, 2
      %s161 = sadd.s32 %s159, %s160
      %s162 = smul.addr %s161, 4
      %s163 = scalar_lea.vmem %s1, %s162
      %p164 = scmp.lt.s32.totalorder %s17, 1
      %s165 = scalar_select %p164, %s17, 1
      %s166 = smul.addr %s165, 2
      %s167 = scalar_lea.vmem %s2, %s166
      %p168 = scmp.eq.s32.totalorder %s18, 0
      // Predicated region
      $region29: #{spatial_attention.1} parent=27 // pred_check
        %p169 = pneg %p168
      $region30: #{spatial_attention.1} parent=27 // pred_check_branch
        %171 = sbr.rel (%p169) target = $region32
      $region31: #{spatial_attention.1} parent=27 // pred_region
        %172 = vst [vmem:[#allocation2] sm:$0xff] 0.0
        %173 = vst [vmem:[#allocation3] sm:$0xff] -inf
      $region32: #{spatial_attention.1} parent=27 // pred_fallthru
        _
      %v174 = vld [vmem:[#allocation2] sm:$0xff]
      %v175 = vld [vmem:[#allocation3] sm:$0xff]
      %v176 = vld [vmem:[%s163] sm:$0xff]
      %v177 = vadd.f32 %v174, %v176
      %v178 = vmax.f32 %v175, %v176
      %179 = vst [vmem:[#allocation2] sm:$0xff] %v177
      %180 = vst [vmem:[#allocation3] sm:$0xff] %v178
      // Predicated region
      $region33: #{spatial_attention.1} parent=27 // pred_check
        %p181 = pneg %p168
      $region34: #{spatial_attention.1} parent=27 // pred_check_branch
        %183 = sbr.rel (%p181) target = $region36
      $region35: #{spatial_attention.1} parent=27 // pred_region
        %v184 = vld [vmem:[#allocation2] sm:$0xff]
        %v186 = vcombine.high %v184, %v184
        %vm188 = vcmask 1043456
        %v189 = vsel %vm188, %v184, 0.0
        %v190 = vrot.slane %v189, 4
        %v191 = vadd.f32 %v189, %v190
        %v192 = vrot.slane %v191, 2
        %v193 = vadd.f32 %v191, %v192
        %v194 = vrot.slane %v193, 1
        %v195 = vadd.f32 %v193, %v194
        %v196 = vsel %vm188, %v186, 0.0
        %v197 = vrot.slane %v196, 4
        %v198 = vadd.f32 %v196, %v197
        %v199 = vrot.slane %v198, 2
        %v200 = vadd.f32 %v198, %v199
        %v201 = vrot.slane %v200, 1
        %v202 = vadd.f32 %v200, %v201
        %v203 = vld [vmem:[#allocation3] sm:$0xff]
        %v205 = vcombine.high %v203, %v203
        %v207 = vsel %vm188, %v203, -inf
        %v208 = vrot.slane %v207, 4
        %v209 = vmax.f32 %v207, %v208
        %v210 = vrot.slane %v209, 2
        %v211 = vmax.f32 %v209, %v210
        %v212 = vrot.slane %v211, 1
        %v213 = vmax.f32 %v211, %v212
        %v214 = vsel %vm188, %v205, -inf
        %v215 = vrot.slane %v214, 4
        %v216 = vmax.f32 %v214, %v215
        %v217 = vrot.slane %v216, 2
        %v218 = vmax.f32 %v216, %v217
        %v219 = vrot.slane %v218, 1
        %v220 = vmax.f32 %v218, %v219
        %v221 = vmul.f32 %v195, 0.25
        %v222 = vmul.f32 %v202, 0.25
        %223 = vrot.lane.b32.xlu0 %v221, 17
        %v224 = vpop.permute.xlu0 %223
        %225 = vrot.lane.b32.xlu0 %v222, 17
        %v226 = vpop.permute.xlu0 %225
        %v227 = vlaneseq
        %v228 = vand.u32 %v227, 127
        %vm229 = vcmp.lt.s32.totalorder %v228, 17
        %v230 = vsel %vm229, %v224, %v226
        %v231 = vsel %vm229, %v226, %v224
        %232 = vrot.lane.b32.xlu0 %v213, 17
        %v233 = vpop.permute.xlu0 %232
        %234 = vrot.lane.b32.xlu0 %v220, 17
        %v235 = vpop.permute.xlu0 %234
        %v236 = vsel %vm229, %v233, %v235
        %v237 = vsel %vm229, %v235, %v233
        %v238 = vld [vmem:[%s0] ss:$8 sm:$0x3]
        %v241 = vcombine.low %v231, %v230
        %v243 = vunpack.c.l.s4 1966171168
        %v244 = vunpack.c.0.s8 %v243
        %v245 = vlaneseq
        %v246 = vshrl.u32 %v245, 7
        %v247 = vsub.s32 %v244, %v246
        %v248 = vrot.slane %v241, %v247
        %v250 = vunpack.c.l.s4 1966171168
        %v251 = vunpack.c.0.s8 %v250
        %v252 = vlaneseq
        %v253 = vshrl.u32 %v252, 7
        %v254 = vsub.s32 %v251, %v253
        %v255 = vrot.slane %v248, %v254
        %v257 = vmul.f32 %v238, %v255
        %v258 = vadd.f32 %v257, 0.0
        %s259 = scalar_lea.vmem %s0, 17
        %v260 = vld [vmem:[%s259] ss:$8 sm:$0x3]
        %v263 = vcombine.low %v237, %v236
        %v265 = vunpack.c.l.s4 1966171168
        %v266 = vunpack.c.0.s8 %v265
        %v267 = vlaneseq
        %v268 = vshrl.u32 %v267, 7
        %v269 = vsub.s32 %v266, %v268
        %v270 = vrot.slane %v263, %v269
        %v272 = vunpack.c.l.s4 1966171168
        %v273 = vunpack.c.0.s8 %v272
        %v274 = vlaneseq
        %v275 = vshrl.u32 %v274, 7
        %v276 = vsub.s32 %v273, %v275
        %v277 = vrot.slane %v270, %v276
        %v279 = vmul.f32 %v260, %v277
        %v280 = vadd.f32 %v258, %v279
        %281 = vrot.lane.b32.xlu0 %v221, 16
        %v282 = vpop.permute.xlu0 %281
        %283 = vrot.lane.b32.xlu0 %v222, 16
        %v284 = vpop.permute.xlu0 %283
        %vm285 = vcmp.lt.s32.totalorder %v228, 16
        %v286 = vsel %vm285, %v282, %v284
        %v287 = vsel %vm285, %v284, %v282
        %288 = vrot.lane.b32.xlu0 %v213, 16
        %v289 = vpop.permute.xlu0 %288
        %290 = vrot.lane.b32.xlu0 %v220, 16
        %v291 = vpop.permute.xlu0 %290
        %v292 = vsel %vm285, %v289, %v291
        %v293 = vsel %vm285, %v291, %v289
        %s294 = scalar_lea.vmem %s0, 1
        %v295 = vld [vmem:[%s294] ss:$8 sm:$0x3]
        %v298 = vcombine.low %v287, %v286
        %v300 = vunpack.c.l.s4 1966171168
        %v301 = vunpack.c.0.s8 %v300
        %v302 = vlaneseq
        %v303 = vshrl.u32 %v302, 7
        %v304 = vsub.s32 %v301, %v303
        %v305 = vrot.slane %v298, %v304
        %v307 = vunpack.c.l.s4 1966171168
        %v308 = vunpack.c.0.s8 %v307
        %v309 = vlaneseq
        %v310 = vshrl.u32 %v309, 7
        %v311 = vsub.s32 %v308, %v310
        %v312 = vrot.slane %v305, %v311
        %v314 = vmul.f32 %v295, %v312
        %v315 = vadd.f32 %v280, %v314
        %s316 = scalar_lea.vmem %s0, 18
        %v317 = vld [vmem:[%s316] ss:$8 sm:$0x3]
        %v320 = vcombine.low %v293, %v292
        %v322 = vunpack.c.l.s4 1966171168
        %v323 = vunpack.c.0.s8 %v322
        %v324 = vlaneseq
        %v325 = vshrl.u32 %v324, 7
        %v326 = vsub.s32 %v323, %v325
        %v327 = vrot.slane %v320, %v326
        %v329 = vunpack.c.l.s4 1966171168
        %v330 = vunpack.c.0.s8 %v329
        %v331 = vlaneseq
        %v332 = vshrl.u32 %v331, 7
        %v333 = vsub.s32 %v330, %v332
        %v334 = vrot.slane %v327, %v333
        %v336 = vmul.f32 %v317, %v334
        %v337 = vadd.f32 %v315, %v336
        %338 = vrot.lane.b32.xlu0 %v221, 15
        %v339 = vpop.permute.xlu0 %338
        %340 = vrot.lane.b32.xlu0 %v222, 15
        %v341 = vpop.permute.xlu0 %340
        %vm342 = vcmp.lt.s32.totalorder %v228, 15
        %v343 = vsel %vm342, %v339, %v341
        %v344 = vsel %vm342, %v341, %v339
        %345 = vrot.lane.b32.xlu0 %v213, 15
        %v346 = vpop.permute.xlu0 %345
        %347 = vrot.lane.b32.xlu0 %v220, 15
        %v348 = vpop.permute.xlu0 %347
        %v349 = vsel %vm342, %v346, %v348
        %v350 = vsel %vm342, %v348, %v346
        %s351 = scalar_lea.vmem %s0, 2
        %v352 = vld [vmem:[%s351] ss:$8 sm:$0x3]
        %v355 = vcombine.low %v344, %v343
        %v357 = vunpack.c.l.s4 1966171168
        %v358 = vunpack.c.0.s8 %v357
        %v359 = vlaneseq
        %v360 = vshrl.u32 %v359, 7
        %v361 = vsub.s32 %v358, %v360
        %v362 = vrot.slane %v355, %v361
        %v364 = vunpack.c.l.s4 1966171168
        %v365 = vunpack.c.0.s8 %v364
        %v366 = vlaneseq
        %v367 = vshrl.u32 %v366, 7
        %v368 = vsub.s32 %v365, %v367
        %v369 = vrot.slane %v362, %v368
        %v371 = vmul.f32 %v352, %v369
        %v372 = vadd.f32 %v337, %v371
        %s373 = scalar_lea.vmem %s0, 19
        %v374 = vld [vmem:[%s373] ss:$8 sm:$0x3]
        %v377 = vcombine.low %v350, %v349
        %v379 = vunpack.c.l.s4 1966171168
        %v380 = vunpack.c.0.s8 %v379
        %v381 = vlaneseq
        %v382 = vshrl.u32 %v381, 7
        %v383 = vsub.s32 %v380, %v382
        %v384 = vrot.slane %v377, %v383
        %v386 = vunpack.c.l.s4 1966171168
        %v387 = vunpack.c.0.s8 %v386
        %v388 = vlaneseq
        %v389 = vshrl.u32 %v388, 7
        %v390 = vsub.s32 %v387, %v389
        %v391 = vrot.slane %v384, %v390
        %v393 = vmul.f32 %v374, %v391
        %v394 = vadd.f32 %v372, %v393
        %395 = vrot.lane.b32.xlu0 %v221, 1
        %v396 = vpop.permute.xlu0 %395
        %397 = vrot.lane.b32.xlu0 %v222, 1
        %v398 = vpop.permute.xlu0 %397
        %vm399 = vcmp.lt.s32.totalorder %v228, 1
        %v400 = vsel %vm399, %v396, %v398
        %v401 = vsel %vm399, %v398, %v396
        %402 = vrot.lane.b32.xlu0 %v213, 1
        %v403 = vpop.permute.xlu0 %402
        %404 = vrot.lane.b32.xlu0 %v220, 1
        %v405 = vpop.permute.xlu0 %404
        %v406 = vsel %vm399, %v403, %v405
        %v407 = vsel %vm399, %v405, %v403
        %s408 = scalar_lea.vmem %s0, 3
        %v409 = vld [vmem:[%s408] ss:$8 sm:$0x3]
        %v412 = vcombine.low %v401, %v400
        %v414 = vunpack.c.l.s4 1966171168
        %v415 = vunpack.c.0.s8 %v414
        %v416 = vlaneseq
        %v417 = vshrl.u32 %v416, 7
        %v418 = vsub.s32 %v415, %v417
        %v419 = vrot.slane %v412, %v418
        %v421 = vunpack.c.l.s4 1966171168
        %v422 = vunpack.c.0.s8 %v421
        %v423 = vlaneseq
        %v424 = vshrl.u32 %v423, 7
        %v425 = vsub.s32 %v422, %v424
        %v426 = vrot.slane %v419, %v425
        %v428 = vmul.f32 %v409, %v426
        %v429 = vadd.f32 %v394, %v428
        %s430 = scalar_lea.vmem %s0, 20
        %v431 = vld [vmem:[%s430] ss:$8 sm:$0x3]
        %v434 = vcombine.low %v407, %v406
        %v436 = vunpack.c.l.s4 1966171168
        %v437 = vunpack.c.0.s8 %v436
        %v438 = vlaneseq
        %v439 = vshrl.u32 %v438, 7
        %v440 = vsub.s32 %v437, %v439
        %v441 = vrot.slane %v434, %v440
        %v443 = vunpack.c.l.s4 1966171168
        %v444 = vunpack.c.0.s8 %v443
        %v445 = vlaneseq
        %v446 = vshrl.u32 %v445, 7
        %v447 = vsub.s32 %v444, %v446
        %v448 = vrot.slane %v441, %v447
        %v450 = vmul.f32 %v431, %v448
        %v451 = vadd.f32 %v429, %v450
        %s452 = scalar_lea.vmem %s0, 4
        %v453 = vld [vmem:[%s452] ss:$8 sm:$0x3]
        %v456 = vcombine.low %v221, %v222
        %v458 = vunpack.c.l.s4 1966171168
        %v459 = vunpack.c.0.s8 %v458
        %v460 = vlaneseq
        %v461 = vshrl.u32 %v460, 7
        %v462 = vsub.s32 %v459, %v461
        %v463 = vrot.slane %v456, %v462
        %v465 = vunpack.c.l.s4 1966171168
        %v466 = vunpack.c.0.s8 %v465
        %v467 = vlaneseq
        %v468 = vshrl.u32 %v467, 7
        %v469 = vsub.s32 %v466, %v468
        %v470 = vrot.slane %v463, %v469
        %v472 = vmul.f32 %v453, %v470
        %v473 = vadd.f32 %v451, %v472
        %s474 = scalar_lea.vmem %s0, 21
        %v475 = vld [vmem:[%s474] ss:$8 sm:$0x3]
        %v478 = vcombine.low %v213, %v220
        %v480 = vunpack.c.l.s4 1966171168
        %v481 = vunpack.c.0.s8 %v480
        %v482 = vlaneseq
        %v483 = vshrl.u32 %v482, 7
        %v484 = vsub.s32 %v481, %v483
        %v485 = vrot.slane %v478, %v484
        %v487 = vunpack.c.l.s4 1966171168
        %v488 = vunpack.c.0.s8 %v487
        %v489 = vlaneseq
        %v490 = vshrl.u32 %v489, 7
        %v491 = vsub.s32 %v488, %v490
        %v492 = vrot.slane %v485, %v491
        %v494 = vmul.f32 %v475, %v492
        %v495 = vadd.f32 %v473, %v494
        %496 = vrot.lane.b32.xlu0 %v221, 127
        %v497 = vpop.permute.xlu0 %496
        %498 = vrot.lane.b32.xlu0 %v222, 127
        %v499 = vpop.permute.xlu0 %498
        %vm500 = vcmp.lt.s32.totalorder %v228, 127
        %v501 = vsel %vm500, %v497, %v499
        %v502 = vsel %vm500, %v499, %v497
        %503 = vrot.lane.b32.xlu0 %v213, 127
        %v504 = vpop.permute.xlu0 %503
        %505 = vrot.lane.b32.xlu0 %v220, 127
        %v506 = vpop.permute.xlu0 %505
        %v507 = vsel %vm500, %v504, %v506
        %v508 = vsel %vm500, %v506, %v504
        %s509 = scalar_lea.vmem %s0, 5
        %v510 = vld [vmem:[%s509] ss:$8 sm:$0x3]
        %v513 = vcombine.low %v501, %v502
        %v515 = vunpack.c.l.s4 1966171168
        %v516 = vunpack.c.0.s8 %v515
        %v517 = vlaneseq
        %v518 = vshrl.u32 %v517, 7
        %v519 = vsub.s32 %v516, %v518
        %v520 = vrot.slane %v513, %v519
        %v522 = vunpack.c.l.s4 1966171168
        %v523 = vunpack.c.0.s8 %v522
        %v524 = vlaneseq
        %v525 = vshrl.u32 %v524, 7
        %v526 = vsub.s32 %v523, %v525
        %v527 = vrot.slane %v520, %v526
        %v529 = vmul.f32 %v510, %v527
        %v530 = vadd.f32 %v495, %v529
        %s531 = scalar_lea.vmem %s0, 22
        %v532 = vld [vmem:[%s531] ss:$8 sm:$0x3]
        %v535 = vcombine.low %v507, %v508
        %v537 = vunpack.c.l.s4 1966171168
        %v538 = vunpack.c.0.s8 %v537
        %v539 = vlaneseq
        %v540 = vshrl.u32 %v539, 7
        %v541 = vsub.s32 %v538, %v540
        %v542 = vrot.slane %v535, %v541
        %v544 = vunpack.c.l.s4 1966171168
        %v545 = vunpack.c.0.s8 %v544
        %v546 = vlaneseq
        %v547 = vshrl.u32 %v546, 7
        %v548 = vsub.s32 %v545, %v547
        %v549 = vrot.slane %v542, %v548
        %v551 = vmul.f32 %v532, %v549
        %v552 = vadd.f32 %v530, %v551
        %553 = vrot.lane.b32.xlu0 %v221, 113
        %v554 = vpop.permute.xlu0 %553
        %555 = vrot.lane.b32.xlu0 %v222, 113
        %v556 = vpop.permute.xlu0 %555
        %vm557 = vcmp.lt.s32.totalorder %v228, 113
        %v558 = vsel %vm557, %v554, %v556
        %v559 = vsel %vm557, %v556, %v554
        %560 = vrot.lane.b32.xlu0 %v213, 113
        %v561 = vpop.permute.xlu0 %560
        %562 = vrot.lane.b32.xlu0 %v220, 113
        %v563 = vpop.permute.xlu0 %562
        %v564 = vsel %vm557, %v561, %v563
        %v565 = vsel %vm557, %v563, %v561
        %s566 = scalar_lea.vmem %s0, 6
        %v567 = vld [vmem:[%s566] ss:$8 sm:$0x3]
        %v570 = vcombine.low %v558, %v559
        %v572 = vunpack.c.l.s4 1966171168
        %v573 = vunpack.c.0.s8 %v572
        %v574 = vlaneseq
        %v575 = vshrl.u32 %v574, 7
        %v576 = vsub.s32 %v573, %v575
        %v577 = vrot.slane %v570, %v576
        %v579 = vunpack.c.l.s4 1966171168
        %v580 = vunpack.c.0.s8 %v579
        %v581 = vlaneseq
        %v582 = vshrl.u32 %v581, 7
        %v583 = vsub.s32 %v580, %v582
        %v584 = vrot.slane %v577, %v583
        %v586 = vmul.f32 %v567, %v584
        %v587 = vadd.f32 %v552, %v586
        %s588 = scalar_lea.vmem %s0, 23
        %v589 = vld [vmem:[%s588] ss:$8 sm:$0x3]
        %v592 = vcombine.low %v564, %v565
        %v594 = vunpack.c.l.s4 1966171168
        %v595 = vunpack.c.0.s8 %v594
        %v596 = vlaneseq
        %v597 = vshrl.u32 %v596, 7
        %v598 = vsub.s32 %v595, %v597
        %v599 = vrot.slane %v592, %v598
        %v601 = vunpack.c.l.s4 1966171168
        %v602 = vunpack.c.0.s8 %v601
        %v603 = vlaneseq
        %v604 = vshrl.u32 %v603, 7
        %v605 = vsub.s32 %v602, %v604
        %v606 = vrot.slane %v599, %v605
        %v608 = vmul.f32 %v589, %v606
        %v609 = vadd.f32 %v587, %v608
        %610 = vrot.lane.b32.xlu0 %v221, 112
        %v611 = vpop.permute.xlu0 %610
        %612 = vrot.lane.b32.xlu0 %v222, 112
        %v613 = vpop.permute.xlu0 %612
        %vm614 = vcmp.lt.s32.totalorder %v228, 112
        %v615 = vsel %vm614, %v611, %v613
        %v616 = vsel %vm614, %v613, %v611
        %617 = vrot.lane.b32.xlu0 %v213, 112
        %v618 = vpop.permute.xlu0 %617
        %619 = vrot.lane.b32.xlu0 %v220, 112
        %v620 = vpop.permute.xlu0 %619
        %v621 = vsel %vm614, %v618, %v620
        %v622 = vsel %vm614, %v620, %v618
        %s623 = scalar_lea.vmem %s0, 7
        %v624 = vld [vmem:[%s623] ss:$8 sm:$0x3]
        %v627 = vcombine.low %v615, %v616
        %v629 = vunpack.c.l.s4 1966171168
        %v630 = vunpack.c.0.s8 %v629
        %v631 = vlaneseq
        %v632 = vshrl.u32 %v631, 7
        %v633 = vsub.s32 %v630, %v632
        %v634 = vrot.slane %v627, %v633
        %v636 = vunpack.c.l.s4 1966171168
        %v637 = vunpack.c.0.s8 %v636
        %v638 = vlaneseq
        %v639 = vshrl.u32 %v638, 7
        %v640 = vsub.s32 %v637, %v639
        %v641 = vrot.slane %v634, %v640
        %v643 = vmul.f32 %v624, %v641
        %v644 = vadd.f32 %v609, %v643
        %s645 = scalar_lea.vmem %s0, 32
        %v646 = vld [vmem:[%s645] ss:$8 sm:$0x3]
        %v649 = vcombine.low %v621, %v622
        %v651 = vunpack.c.l.s4 1966171168
        %v652 = vunpack.c.0.s8 %v651
        %v653 = vlaneseq
        %v654 = vshrl.u32 %v653, 7
        %v655 = vsub.s32 %v652, %v654
        %v656 = vrot.slane %v649, %v655
        %v658 = vunpack.c.l.s4 1966171168
        %v659 = vunpack.c.0.s8 %v658
        %v660 = vlaneseq
        %v661 = vshrl.u32 %v660, 7
        %v662 = vsub.s32 %v659, %v661
        %v663 = vrot.slane %v656, %v662
        %v665 = vmul.f32 %v646, %v663
        %v666 = vadd.f32 %v644, %v665
        %667 = vrot.lane.b32.xlu0 %v221, 111
        %v668 = vpop.permute.xlu0 %667
        %669 = vrot.lane.b32.xlu0 %v222, 111
        %v670 = vpop.permute.xlu0 %669
        %vm671 = vcmp.lt.s32.totalorder %v228, 111
        %v672 = vsel %vm671, %v668, %v670
        %v673 = vsel %vm671, %v670, %v668
        %674 = vrot.lane.b32.xlu0 %v213, 111
        %v675 = vpop.permute.xlu0 %674
        %676 = vrot.lane.b32.xlu0 %v220, 111
        %v677 = vpop.permute.xlu0 %676
        %v678 = vsel %vm671, %v675, %v677
        %v679 = vsel %vm671, %v677, %v675
        %s680 = scalar_lea.vmem %s0, 16
        %v681 = vld [vmem:[%s680] ss:$8 sm:$0x3]
        %v684 = vcombine.low %v672, %v673
        %v686 = vunpack.c.l.s4 1966171168
        %v687 = vunpack.c.0.s8 %v686
        %v688 = vlaneseq
        %v689 = vshrl.u32 %v688, 7
        %v690 = vsub.s32 %v687, %v689
        %v691 = vrot.slane %v684, %v690
        %v693 = vunpack.c.l.s4 1966171168
        %v694 = vunpack.c.0.s8 %v693
        %v695 = vlaneseq
        %v696 = vshrl.u32 %v695, 7
        %v697 = vsub.s32 %v694, %v696
        %v698 = vrot.slane %v691, %v697
        %v700 = vmul.f32 %v681, %v698
        %v701 = vadd.f32 %v666, %v700
        %s702 = scalar_lea.vmem %s0, 33
        %v703 = vld [vmem:[%s702] ss:$8 sm:$0x3]
        %v706 = vcombine.low %v678, %v679
        %v708 = vunpack.c.l.s4 1966171168
        %v709 = vunpack.c.0.s8 %v708
        %v710 = vlaneseq
        %v711 = vshrl.u32 %v710, 7
        %v712 = vsub.s32 %v709, %v711
        %v713 = vrot.slane %v706, %v712
        %v715 = vunpack.c.l.s4 1966171168
        %v716 = vunpack.c.0.s8 %v715
        %v717 = vlaneseq
        %v718 = vshrl.u32 %v717, 7
        %v719 = vsub.s32 %v716, %v718
        %v720 = vrot.slane %v713, %v719
        %v722 = vmul.f32 %v703, %v720
        %v723 = vadd.f32 %v701, %v722
        %v724 = vsub.f32 0.0, %v723
        %v725 = vmul.f32 %v724, 1.442695
        %v726 = vpow.pop %v725
        %v727 = vadd.f32 %v726, 1.0
        %v728 = vrcp.pop %v727
        %v729 = vlaneseq
        %vm730 = vcmp.ge.s32.totalorder %v729, 0
        %vm731 = vcmp.lt.s32.totalorder %v729, 256
        %vm732 = vmand %vm730, %vm731
        %733 = vst.msk [vmem:[%s167] sm:$0x3] %vm732, %v728
      $region36: #{spatial_attention.1} parent=27 // pred_fallthru
        _
      %p734 = scmp.lt.s32.totalorder %s17, 1
      %s735 = scalar_select %p734, %s17, 1
      %s736 = smul.addr %s735, 2
      %s737 = scalar_lea.vmem %s2, %s736
      // Predicated region
      $region37: #{spatial_attention.1} parent=27 // pred_check
        %p738 = pneg %p92
      $region38: #{spatial_attention.1} parent=27 // pred_check_branch
        %740 = sbr.rel (%p738) target = $region40
      $region39: #{spatial_attention.1} parent=27 // pred_region
        _
      $region40: #{spatial_attention.1} parent=27 // pred_fallthru
        _
    $region28: #{spatial_attention.1} parent=5 // pred_fallthru
      _
    %p741 = scmp.le.s32.totalorder 2, %s8
    // Predicated region
    $region41: #{spatial_attention.1} parent=5 // pred_check
      %p742 = pneg %p741
    $region42: #{spatial_attention.1} parent=5 // pred_check_branch
      %744 = sbr.rel (%p742) target = $region44
    $region43: #{spatial_attention.1} parent=5 // pred_region
      %s745 = ssub.s32 %s8, 2
      // Predicated region
      $region45: #{spatial_attention.1} parent=43 // pred_check
        %p746 = pneg %p98
      $region46: #{spatial_attention.1} parent=43 // pred_check_branch
        %748 = sbr.rel (%p746) target = $region48
      $region47: #{spatial_attention.1} parent=43 // pred_region
        %p749 = scmp.lt.s32.totalorder %s19, 1
        %s750 = scalar_select %p749, %s19, 1
        %s751 = smul.addr %s750, 2
        %s752 = scalar_lea.vmem %s2, %s751
      $region48: #{spatial_attention.1} parent=43 // pred_fallthru
        _
    $region44: #{spatial_attention.1} parent=5 // pred_fallthru
      _
  $region6: #{spatial_attention.1} parent=0 // loop_footer
    %s12 = sadd.s32 1, %s8
  $region7: #{spatial_attention.1} parent=0 // loop_footer_branch
    %7 = sbr.rel target = $region3
  $region8: #{spatial_attention.1} parent=0 // loop_exit
    _

</llo_original>
